<compile_context>
chip_gen: v5e
topology: v5e:2x2
jax: 0.10.0
libtpu: 0.0.40
codegen_flags: <defaults>
</compile_context>

<pallas_src>
import math

import jax
import jax.numpy as jnp
from jax.experimental import pallas as pl
from jax.experimental.pallas import tpu as pltpu

D_MODEL = 96


def _pointer_kernel(w_ref, m1_ref, m2_ref, m3_ref, mask_ref, p1_ref, p2_ref):
    # w_ref:    (D, 4) f32, columns = [w1[:D], w1[D:], w2[:D], w2[D:]]
    # m*_ref:   (TB, D, L) native dtype
    # mask_ref: (TB, L) f32 ; p*_ref: (TB, L) f32
    m1 = m1_ref[...].astype(jnp.float32)
    m2 = m2_ref[...].astype(jnp.float32)
    m3 = m3_ref[...].astype(jnp.float32)

    w = w_ref[...]                       # (D, 4)
    w1a = w[:, 0:1][None, :, :]          # (1, D, 1) -> broadcasts over (TB, D, L)
    w1b = w[:, 1:2][None, :, :]
    w2a = w[:, 2:3][None, :, :]
    w2b = w[:, 3:4][None, :, :]

    # Reduction over D (sublane axis of each (D, L) tile) -> (TB, L).
    y1 = jnp.sum(m1 * w1a + m2 * w1b, axis=1)
    y2 = jnp.sum(m1 * w2a + m3 * w2b, axis=1)

    masked = mask_ref[...] != 0.0
    neg = jnp.float32(-1e30)
    y1 = jnp.where(masked, neg, y1)
    y2 = jnp.where(masked, neg, y2)

    def _log_softmax(y):
        m = jnp.max(y, axis=-1, keepdims=True)
        s = y - m
        lse = jnp.log(jnp.sum(jnp.exp(s), axis=-1, keepdims=True))
        return s - lse

    p1_ref[...] = _log_softmax(y1)
    p2_ref[...] = _log_softmax(y2)


def _pick_block_b(B):
    # Prefer TB that (a) divides B, (b) keeps mask/output blocks 8-sublane
    # aligned, and (c) leaves >= 2 grid steps when possible (v7x megacore).
    for tb in (8, 16):
        if B % tb == 0:
            return tb
    # Fall back to the whole batch in one step: block == full dim is always
    # a legal block shape and the test/small-batch case stays tiny in VMEM.
    return B


def pointer_forward(w1, w2, M1, M2, M3, mask):
    """w1, w2: (2*d_model,) ; M1/M2/M3: (B, d_model, L) ; mask: (B, L)."""
    B, D, L = M1.shape

    # Tiny, one-off glue on the host side: pack the four weight halves as
    # columns of a (D, 4) matrix so they broadcast along sublanes in-kernel.
    w1_2 = w1.reshape(2, D)
    w2_2 = w2.reshape(2, D)
    w_packed = jnp.stack([w1_2[0], w1_2[1], w2_2[0], w2_2[1]],
                         axis=1).astype(jnp.float32)          # (D, 4)
    mask_f = mask.astype(jnp.float32)                         # (B, L), tiny

    TB = _pick_block_b(B)
    grid = (B // TB,)

    out_shape = (jax.ShapeDtypeStruct((B, L), jnp.float32),
                 jax.ShapeDtypeStruct((B, L), jnp.float32))

    grid_spec = pltpu.PrefetchScalarGridSpec(
        num_scalar_prefetch=0,
        grid=grid,
        in_specs=[
            pl.BlockSpec((D, 4), lambda b: (0, 0)),            # packed weights
            pl.BlockSpec((TB, D, L), lambda b: (b, 0, 0)),     # M1 (native dtype)
            pl.BlockSpec((TB, D, L), lambda b: (b, 0, 0)),     # M2
            pl.BlockSpec((TB, D, L), lambda b: (b, 0, 0)),     # M3
            pl.BlockSpec((TB, L), lambda b: (b, 0)),           # mask
        ],
        out_specs=[
            pl.BlockSpec((TB, L), lambda b: (b, 0)),           # p1
            pl.BlockSpec((TB, L), lambda b: (b, 0)),           # p2
        ],
    )

    return pl.pallas_call(
        _pointer_kernel,
        out_shape=out_shape,
        grid_spec=grid_spec,
        compiler_params=pltpu.CompilerParams(
            dimension_semantics=("parallel",)),
    )(w_packed, M1, M2, M3, mask_f)


def pointer_reference(w1, w2, M1, M2, M3, mask):
    X1 = jnp.concatenate([M1, M2], axis=1)      # (B, 2D, L)
    X2 = jnp.concatenate([M1, M3], axis=1)
    Y1 = jnp.einsum("d,bdl->bl", w1, X1.astype(jnp.float32))
    Y2 = jnp.einsum("d,bdl->bl", w2, X2.astype(jnp.float32))
    m = mask.astype(jnp.float32)
    Y1 = Y1 * (1 - m) + m * (-1e30)
    Y2 = Y2 * (1 - m) + m * (-1e30)
    return jax.nn.log_softmax(Y1, axis=1), jax.nn.log_softmax(Y2, axis=1)


if __name__ == "__main__":
    key = jax.random.PRNGKey(0)
    kw1, kw2, k1, k2, k3, km = jax.random.split(key, 6)

    B, L = 2, 128

    # deterministic parameter init matching nn.init.uniform_(-sqrt(lim), sqrt(lim))
    lim = 3.0 / (2 * D_MODEL)
    bound = math.sqrt(lim)
    w1 = jax.random.uniform(kw1, (2 * D_MODEL,), jnp.float32, -bound, bound)
    w2 = jax.random.uniform(kw2, (2 * D_MODEL,), jnp.float32, -bound, bound)

    M1 = jax.random.normal(k1, (B, D_MODEL, L), jnp.float32)
    M2 = jax.random.normal(k2, (B, D_MODEL, L), jnp.float32)
    M3 = jax.random.normal(k3, (B, D_MODEL, L), jnp.float32)
    mask = (jax.random.uniform(km, (B, L)) < 0.3).astype(jnp.float32)

    p1, p2 = pointer_forward(w1, w2, M1, M2, M3, mask)
    jax.block_until_ready((p1, p2))

    r1, r2 = pointer_reference(w1, w2, M1, M2, M3, mask)
    assert jnp.allclose(p1, r1, atol=1e-4, rtol=1e-4)
    assert jnp.allclose(p2, r2, atol=1e-4, rtol=1e-4)

    print("KERNEL_OK")
</pallas_src>

<mosaic_0001>
module attributes {stable_mosaic.version = 11 : i64} {
  func.func @_pointer_kernel(%arg0: i32, %arg1: memref<96x4xf32, #tpu.memory_space<vmem>>, %arg2: memref<2x96x128xf32, #tpu.memory_space<vmem>>, %arg3: memref<2x96x128xf32, #tpu.memory_space<vmem>>, %arg4: memref<2x96x128xf32, #tpu.memory_space<vmem>>, %arg5: memref<2x128xf32, #tpu.memory_space<vmem>>, %arg6: memref<2x128xf32, #tpu.memory_space<vmem>>, %arg7: memref<2x128xf32, #tpu.memory_space<vmem>>) attributes {dimension_semantics = [#tpu.dimension_semantics<parallel>], iteration_bounds = array<i64: 1>, scalar_prefetch = 0 : i64, scratch_operands = 0 : i64, tpu.core_type = #tpu.core_type<tc>, window_params = [{pipeline_mode = #tpu.pipeline_mode<synchronous>, transform_indices = @transform_0, window_bounds = array<i64: 96, 4>}, {transform_indices = @transform_1, window_bounds = array<i64: 2, 96, 128>}, {transform_indices = @transform_2, window_bounds = array<i64: 2, 96, 128>}, {transform_indices = @transform_3, window_bounds = array<i64: 2, 96, 128>}, {transform_indices = @transform_4, window_bounds = array<i64: 2, 128>}, {transform_indices = @transform_5, window_bounds = array<i64: 2, 128>}, {transform_indices = @transform_6, window_bounds = array<i64: 2, 128>}]} {
    %c0 = arith.constant 0 : index
    %c0_0 = arith.constant 0 : index
    %c0_1 = arith.constant 0 : index
    %0 = vector.load %arg2[%c0, %c0_0, %c0_1] : memref<2x96x128xf32, #tpu.memory_space<vmem>>, vector<2x96x128xf32>
    %c0_2 = arith.constant 0 : index
    %c0_3 = arith.constant 0 : index
    %c0_4 = arith.constant 0 : index
    %1 = vector.load %arg3[%c0_2, %c0_3, %c0_4] : memref<2x96x128xf32, #tpu.memory_space<vmem>>, vector<2x96x128xf32>
    %c0_5 = arith.constant 0 : index
    %c0_6 = arith.constant 0 : index
    %c0_7 = arith.constant 0 : index
    %2 = vector.load %arg4[%c0_5, %c0_6, %c0_7] : memref<2x96x128xf32, #tpu.memory_space<vmem>>, vector<2x96x128xf32>
    %c0_8 = arith.constant 0 : index
    %c0_9 = arith.constant 0 : index
    %3 = vector.load %arg1[%c0_8, %c0_9] : memref<96x4xf32, #tpu.memory_space<vmem>>, vector<96x4xf32>
    %4 = vector.extract_strided_slice %3 {offsets = [0, 0], sizes = [96, 1], strides = [1, 1]} : vector<96x4xf32> to vector<96x1xf32>
    %5 = vector.shape_cast %4 : vector<96x1xf32> to vector<1x96x1xf32>
    %6 = vector.extract_strided_slice %3 {offsets = [0, 1], sizes = [96, 1], strides = [1, 1]} : vector<96x4xf32> to vector<96x1xf32>
    %7 = vector.shape_cast %6 : vector<96x1xf32> to vector<1x96x1xf32>
    %8 = vector.extract_strided_slice %3 {offsets = [0, 2], sizes = [96, 1], strides = [1, 1]} : vector<96x4xf32> to vector<96x1xf32>
    %9 = vector.shape_cast %8 : vector<96x1xf32> to vector<1x96x1xf32>
    %10 = vector.extract_strided_slice %3 {offsets = [0, 3], sizes = [96, 1], strides = [1, 1]} : vector<96x4xf32> to vector<96x1xf32>
    %11 = vector.shape_cast %10 : vector<96x1xf32> to vector<1x96x1xf32>
    %12 = vector.broadcast %5 : vector<1x96x1xf32> to vector<2x96x128xf32>
    %13 = arith.mulf %0, %12 : vector<2x96x128xf32>
    %14 = vector.broadcast %7 : vector<1x96x1xf32> to vector<2x96x128xf32>
    %15 = arith.mulf %1, %14 : vector<2x96x128xf32>
    %16 = arith.addf %13, %15 : vector<2x96x128xf32>
    %cst = arith.constant dense<0.000000e+00> : vector<2x128xf32>
    %17 = vector.multi_reduction <add>, %16, %cst [1] : vector<2x96x128xf32> to vector<2x128xf32>
    %18 = vector.broadcast %9 : vector<1x96x1xf32> to vector<2x96x128xf32>
    %19 = arith.mulf %0, %18 : vector<2x96x128xf32>
    %20 = vector.broadcast %11 : vector<1x96x1xf32> to vector<2x96x128xf32>
    %21 = arith.mulf %2, %20 : vector<2x96x128xf32>
    %22 = arith.addf %19, %21 : vector<2x96x128xf32>
    %cst_10 = arith.constant dense<0.000000e+00> : vector<2x128xf32>
    %23 = vector.multi_reduction <add>, %22, %cst_10 [1] : vector<2x96x128xf32> to vector<2x128xf32>
    %c0_11 = arith.constant 0 : index
    %c0_12 = arith.constant 0 : index
    %24 = vector.load %arg5[%c0_11, %c0_12] : memref<2x128xf32, #tpu.memory_space<vmem>>, vector<2x128xf32>
    %cst_13 = arith.constant 0.000000e+00 : f32
    %25 = vector.broadcast %cst_13 : f32 to vector<2x128xf32>
    %26 = arith.cmpf one, %24, %25 : vector<2x128xf32>
    %cst_14 = arith.constant -1.000000e+30 : f32
    %27 = vector.broadcast %cst_14 : f32 to vector<2x128xf32>
    %28 = arith.select %26, %27, %17 : vector<2x128xi1>, vector<2x128xf32>
    %cst_15 = arith.constant -1.000000e+30 : f32
    %29 = vector.broadcast %cst_15 : f32 to vector<2x128xf32>
    %30 = arith.select %26, %29, %23 : vector<2x128xi1>, vector<2x128xf32>
    %cst_16 = arith.constant dense<0xFF800000> : vector<2xf32>
    %31 = vector.multi_reduction <maximumf>, %28, %cst_16 [1] : vector<2x128xf32> to vector<2xf32>
    %32 = vector.shape_cast %31 : vector<2xf32> to vector<2x1xf32>
    %33 = vector.broadcast %32 : vector<2x1xf32> to vector<2x128xf32>
    %34 = arith.subf %28, %33 : vector<2x128xf32>
    %35 = math.exp %34 : vector<2x128xf32>
    %cst_17 = arith.constant dense<0.000000e+00> : vector<2xf32>
    %36 = vector.multi_reduction <add>, %35, %cst_17 [1] : vector<2x128xf32> to vector<2xf32>
    %37 = vector.shape_cast %36 : vector<2xf32> to vector<2x1xf32>
    %38 = math.log %37 : vector<2x1xf32>
    %39 = vector.broadcast %38 : vector<2x1xf32> to vector<2x128xf32>
    %40 = arith.subf %34, %39 : vector<2x128xf32>
    %c0_18 = arith.constant 0 : index
    %c0_19 = arith.constant 0 : index
    %41 = vector.load %arg6[%c0_18, %c0_19] : memref<2x128xf32, #tpu.memory_space<vmem>>, vector<2x128xf32>
    tpu.vector_store %arg6[%c0_18, %c0_19], %40 {strides = array<i32>} : memref<2x128xf32, #tpu.memory_space<vmem>>, vector<2x128xf32>,
    %cst_20 = arith.constant dense<0xFF800000> : vector<2xf32>
    %42 = vector.multi_reduction <maximumf>, %30, %cst_20 [1] : vector<2x128xf32> to vector<2xf32>
    %43 = vector.shape_cast %42 : vector<2xf32> to vector<2x1xf32>
    %44 = vector.broadcast %43 : vector<2x1xf32> to vector<2x128xf32>
    %45 = arith.subf %30, %44 : vector<2x128xf32>
    %46 = math.exp %45 : vector<2x128xf32>
    %cst_21 = arith.constant dense<0.000000e+00> : vector<2xf32>
    %47 = vector.multi_reduction <add>, %46, %cst_21 [1] : vector<2x128xf32> to vector<2xf32>
    %48 = vector.shape_cast %47 : vector<2xf32> to vector<2x1xf32>
    %49 = math.log %48 : vector<2x1xf32>
    %50 = vector.broadcast %49 : vector<2x1xf32> to vector<2x128xf32>
    %51 = arith.subf %45, %50 : vector<2x128xf32>
    %c0_22 = arith.constant 0 : index
    %c0_23 = arith.constant 0 : index
    %52 = vector.load %arg7[%c0_22, %c0_23] : memref<2x128xf32, #tpu.memory_space<vmem>>, vector<2x128xf32>
    tpu.vector_store %arg7[%c0_22, %c0_23], %51 {strides = array<i32>} : memref<2x128xf32, #tpu.memory_space<vmem>>, vector<2x128xf32>,
    return
  }
  func.func @transform_0(%arg0: i32) -> (i32, i32) {
    %c0_i32 = arith.constant 0 : i32
    %c0_i32_0 = arith.constant 0 : i32
    %c0_i32_1 = arith.constant 0 : i32
    return %c0_i32, %c0_i32_0 : i32, i32
  }
  func.func @transform_1(%arg0: i32) -> (i32, i32, i32) {
    %c0_i32 = arith.constant 0 : i32
    %c0_i32_0 = arith.constant 0 : i32
    %c0_i32_1 = arith.constant 0 : i32
    return %arg0, %c0_i32, %c0_i32_0 : i32, i32, i32
  }
  func.func @transform_2(%arg0: i32) -> (i32, i32, i32) {
    %c0_i32 = arith.constant 0 : i32
    %c0_i32_0 = arith.constant 0 : i32
    %c0_i32_1 = arith.constant 0 : i32
    return %arg0, %c0_i32, %c0_i32_0 : i32, i32, i32
  }
  func.func @transform_3(%arg0: i32) -> (i32, i32, i32) {
    %c0_i32 = arith.constant 0 : i32
    %c0_i32_0 = arith.constant 0 : i32
    %c0_i32_1 = arith.constant 0 : i32
    return %arg0, %c0_i32, %c0_i32_0 : i32, i32, i32
  }
  func.func @transform_4(%arg0: i32) -> (i32, i32) {
    %c0_i32 = arith.constant 0 : i32
    %c0_i32_0 = arith.constant 0 : i32
    return %arg0, %c0_i32 : i32, i32
  }
  func.func @transform_5(%arg0: i32) -> (i32, i32) {
    %c0_i32 = arith.constant 0 : i32
    %c0_i32_0 = arith.constant 0 : i32
    return %arg0, %c0_i32 : i32, i32
  }
  func.func @transform_6(%arg0: i32) -> (i32, i32) {
    %c0_i32 = arith.constant 0 : i32
    %c0_i32_0 = arith.constant 0 : i32
    return %arg0, %c0_i32 : i32, i32
  }
}

</mosaic_0001>

<llo_original>
// kernel: tpu_custom_call.1
$region0: #{tpu_custom_call.1}
  #allocation0 [shape = 'u32[]', space=smem, size = 0x4, offset = 0x4, fixed_abs, tag = 'smem constant byte address 0x4 - core index']
  #allocation1 [shape = 'u32[72,128]{1,0:T(1,128)}', space=vmem, size = 0x9000, scoped, tag = 'internal scratch']
  %s0 = inlined_call_operand.vmem [shape: f32[96,4], index: 0, kind: input, shape index: {}]
  %s1 = inlined_call_operand.hbm [shape: f32[2,96,128], index: 1, kind: input, shape index: {}]
  %s2 = inlined_call_operand.hbm [shape: f32[2,96,128], index: 2, kind: input, shape index: {}]
  %s3 = inlined_call_operand.hbm [shape: f32[2,96,128], index: 3, kind: input, shape index: {}]
  %s4 = inlined_call_operand.vmem [shape: f32[2,128], index: 4, kind: input, shape index: {}]
  %s5 = inlined_call_operand.hbm [shape: f32[2,128], index: 5, kind: output, shape index: {0}]
  %s6 = inlined_call_operand.hbm [shape: f32[2,128], index: 6, kind: output, shape index: {1}]
  %7 = xla_tuple %s5, %s6
  %s8 = sld [smem:[#allocation0]]
  $region50: #{tpu_custom_call.1} parent=0
    _
  %s10 = ssub.s32 1, %s8
  %s11 = scalar_select 0, %s10, %s8
  $region1: #{tpu_custom_call.1} parent=0
    #allocation2 [shape = 'u8[98304]{0}', space=vmem, size = 0x18000, scoped, tag = 'input window, operand 1, single buffered']
    #allocation3 [shape = 's32[1]{0}', space=sflag, size = 0x4, scoped, tag = 'scoped memory for tpu_custom_call.1']
    #allocation4 [shape = 's32[1]{0}', space=sflag, size = 0x4, scoped, tag = 'scoped memory for tpu_custom_call.1']
    #allocation5 [shape = 'u8[98304]{0}', space=vmem, size = 0x18000, scoped, tag = 'input window, operand 2, single buffered']
    #allocation6 [shape = 's32[1]{0}', space=sflag, size = 0x4, scoped, tag = 'scoped memory for tpu_custom_call.1']
    #allocation7 [shape = 'u8[98304]{0}', space=vmem, size = 0x18000, scoped, tag = 'input window, operand 3, single buffered']
    #allocation8 [shape = 'u8[1024]{0}', space=vmem, size = 0x400, scoped, tag = 'output window, operand 0, single buffered']
    #allocation9 [shape = 'u8[1024]{0}', space=vmem, size = 0x400, scoped, tag = 'output window, operand 1, single buffered']
    #allocation10 [shape = 's32[1]{0}', space=sflag, size = 0x4, scoped, tag = 'scoped memory for tpu_custom_call.1']
    %12 = vsyncpa [#allocation3], 0
    %13 = vsyncpa [#allocation6], 0
    %14 = vsyncpa [#allocation4], 0
    %15 = vsyncpa [#allocation10], 0
    // Predicated region
    $region2: #{tpu_custom_call.1} parent=1 // pred_check
      _
    $region3: #{tpu_custom_call.1} parent=1 // pred_check_branch
      %17 = sbr.rel (0) target = $region5
    $region4: #{tpu_custom_call.1} parent=1 // pred_region
      _
    $region5: #{tpu_custom_call.1} parent=1 // pred_fallthru
      _
    // Predicated region
    $region6: #{tpu_custom_call.1} parent=1 // pred_check
      _
    $region7: #{tpu_custom_call.1} parent=1 // pred_check_branch
      %19 = sbr.rel (0) target = $region9
    $region8: #{tpu_custom_call.1} parent=1 // pred_region
      %21 = vsyncadd [#allocation3], 0
      %s22 = sshll.u32 %s1, 4
      %s23 = int_to_ptr.hbm [resolvable:$true] %s22
      %s24 = sshll.u32 [#allocation2], 4
      %s25 = int_to_ptr.vmem [resolvable:$true] %s24
      %30 = dma.hbm_to_vmem [thread:$0]  %s23, 3072, %s25, [#allocation3], 128, 128, 8
    $region9: #{tpu_custom_call.1} parent=1 // pred_fallthru
      _
    // Predicated region
    $region10: #{tpu_custom_call.1} parent=1 // pred_check
      _
    $region11: #{tpu_custom_call.1} parent=1 // pred_check_branch
      %32 = sbr.rel (0) target = $region13
    $region12: #{tpu_custom_call.1} parent=1 // pred_region
      %34 = vsyncadd [#allocation6], 0
      %s35 = sshll.u32 %s2, 4
      %s36 = int_to_ptr.hbm [resolvable:$true] %s35
      %s37 = sshll.u32 [#allocation5], 4
      %s38 = int_to_ptr.vmem [resolvable:$true] %s37
      %43 = dma.hbm_to_vmem [thread:$0]  %s36, 3072, %s38, [#allocation6], 128, 128, 8
    $region13: #{tpu_custom_call.1} parent=1 // pred_fallthru
      _
    // Predicated region
    $region14: #{tpu_custom_call.1} parent=1 // pred_check
      _
    $region15: #{tpu_custom_call.1} parent=1 // pred_check_branch
      %45 = sbr.rel (0) target = $region17
    $region16: #{tpu_custom_call.1} parent=1 // pred_region
      %47 = vsyncadd [#allocation6], 0
      %s48 = sshll.u32 %s3, 4
      %s49 = int_to_ptr.hbm [resolvable:$true] %s48
      %s50 = sshll.u32 [#allocation7], 4
      %s51 = int_to_ptr.vmem [resolvable:$true] %s50
      %56 = dma.hbm_to_vmem [thread:$0]  %s49, 3072, %s51, [#allocation6], 128, 128, 8
    $region17: #{tpu_custom_call.1} parent=1 // pred_fallthru
      _
    // Predicated region
    $region18: #{tpu_custom_call.1} parent=1 // pred_check
      _
    $region19: #{tpu_custom_call.1} parent=1 // pred_check_branch
      %58 = sbr.rel (0) target = $region21
    $region20: #{tpu_custom_call.1} parent=1 // pred_region
      _
    $region21: #{tpu_custom_call.1} parent=1 // pred_fallthru
      _
    // Predicated region
    $region22: #{tpu_custom_call.1} parent=1 // pred_check
      _
    $region23: #{tpu_custom_call.1} parent=1 // pred_check_branch
      %60 = sbr.rel (0) target = $region25
    $region24: #{tpu_custom_call.1} parent=1 // pred_region
      %62 = dma.done [#allocation3], 3072
    $region25: #{tpu_custom_call.1} parent=1 // pred_fallthru
      _
    // Predicated region
    $region26: #{tpu_custom_call.1} parent=1 // pred_check
      _
    $region27: #{tpu_custom_call.1} parent=1 // pred_check_branch
      %64 = sbr.rel (0) target = $region29
    $region28: #{tpu_custom_call.1} parent=1 // pred_region
      %66 = dma.done [#allocation6], 3072
    $region29: #{tpu_custom_call.1} parent=1 // pred_fallthru
      _
    // Predicated region
    $region30: #{tpu_custom_call.1} parent=1 // pred_check
      _
    $region31: #{tpu_custom_call.1} parent=1 // pred_check_branch
      %68 = sbr.rel (0) target = $region33
    $region32: #{tpu_custom_call.1} parent=1 // pred_region
      %70 = dma.done [#allocation6], 3072
    $region33: #{tpu_custom_call.1} parent=1 // pred_fallthru
      _
    %v71 = vld [vmem:[#allocation2] sm:$0xff]
    %v72 = vld [vmem:[#allocation2 + $0x8] sm:$0xff]
    %v73 = vld [vmem:[#allocation2 + $0x10] sm:$0xff]
    %v74 = vld [vmem:[#allocation2 + $0x18] sm:$0xff]
    %v75 = vld [vmem:[#allocation2 + $0x20] sm:$0xff]
    %v76 = vld [vmem:[#allocation2 + $0x28] sm:$0xff]
    %v77 = vld [vmem:[#allocation2 + $0x30] sm:$0xff]
    %v78 = vld [vmem:[#allocation2 + $0x38] sm:$0xff]
    %v79 = vld [vmem:[#allocation2 + $0x40] sm:$0xff]
    %v80 = vld [vmem:[#allocation2 + $0x48] sm:$0xff]
    %v81 = vld [vmem:[#allocation2 + $0x50] sm:$0xff]
    %v82 = vld [vmem:[#allocation2 + $0x58] sm:$0xff]
    %v83 = vld [vmem:[#allocation2 + $0x60] sm:$0xff]
    %v84 = vld [vmem:[#allocation2 + $0x68] sm:$0xff]
    %v85 = vld [vmem:[#allocation2 + $0x70] sm:$0xff]
    %v86 = vld [vmem:[#allocation2 + $0x78] sm:$0xff]
    %v87 = vld [vmem:[#allocation2 + $0x80] sm:$0xff]
    %v88 = vld [vmem:[#allocation2 + $0x88] sm:$0xff]
    %v89 = vld [vmem:[#allocation2 + $0x90] sm:$0xff]
    %v90 = vld [vmem:[#allocation2 + $0x98] sm:$0xff]
    %v91 = vld [vmem:[#allocation2 + $0xa0] sm:$0xff]
    %v92 = vld [vmem:[#allocation2 + $0xa8] sm:$0xff]
    %v93 = vld [vmem:[#allocation2 + $0xb0] sm:$0xff]
    %v94 = vld [vmem:[#allocation2 + $0xb8] sm:$0xff]
    %v95 = vld [vmem:[#allocation5] sm:$0xff]
    %v96 = vld [vmem:[#allocation5 + $0x8] sm:$0xff]
    %v97 = vld [vmem:[#allocation5 + $0x10] sm:$0xff]
    %v98 = vld [vmem:[#allocation5 + $0x18] sm:$0xff]
    %v99 = vld [vmem:[#allocation5 + $0x20] sm:$0xff]
    %v100 = vld [vmem:[#allocation5 + $0x28] sm:$0xff]
    %v101 = vld [vmem:[#allocation5 + $0x30] sm:$0xff]
    %v102 = vld [vmem:[#allocation5 + $0x38] sm:$0xff]
    %v103 = vld [vmem:[#allocation5 + $0x40] sm:$0xff]
    %v104 = vld [vmem:[#allocation5 + $0x48] sm:$0xff]
    %v105 = vld [vmem:[#allocation5 + $0x50] sm:$0xff]
    %v106 = vld [vmem:[#allocation5 + $0x58] sm:$0xff]
    %v107 = vld [vmem:[#allocation5 + $0x60] sm:$0xff]
    %v108 = vld [vmem:[#allocation5 + $0x68] sm:$0xff]
    %v109 = vld [vmem:[#allocation5 + $0x70] sm:$0xff]
    %v110 = vld [vmem:[#allocation5 + $0x78] sm:$0xff]
    %v111 = vld [vmem:[#allocation5 + $0x80] sm:$0xff]
    %v112 = vld [vmem:[#allocation5 + $0x88] sm:$0xff]
    %v113 = vld [vmem:[#allocation5 + $0x90] sm:$0xff]
    %v114 = vld [vmem:[#allocation5 + $0x98] sm:$0xff]
    %v115 = vld [vmem:[#allocation5 + $0xa0] sm:$0xff]
    %v116 = vld [vmem:[#allocation5 + $0xa8] sm:$0xff]
    %v117 = vld [vmem:[#allocation5 + $0xb0] sm:$0xff]
    %v118 = vld [vmem:[#allocation5 + $0xb8] sm:$0xff]
    %v119 = vld [vmem:[#allocation7] sm:$0xff]
    %v120 = vld [vmem:[#allocation7 + $0x8] sm:$0xff]
    %v121 = vld [vmem:[#allocation7 + $0x10] sm:$0xff]
    %v122 = vld [vmem:[#allocation7 + $0x18] sm:$0xff]
    %v123 = vld [vmem:[#allocation7 + $0x20] sm:$0xff]
    %v124 = vld [vmem:[#allocation7 + $0x28] sm:$0xff]
    %v125 = vld [vmem:[#allocation7 + $0x30] sm:$0xff]
    %v126 = vld [vmem:[#allocation7 + $0x38] sm:$0xff]
    %v127 = vld [vmem:[#allocation7 + $0x40] sm:$0xff]
    %v128 = vld [vmem:[#allocation7 + $0x48] sm:$0xff]
    %v129 = vld [vmem:[#allocation7 + $0x50] sm:$0xff]
    %v130 = vld [vmem:[#allocation7 + $0x58] sm:$0xff]
    %v131 = vld [vmem:[#allocation7 + $0x60] sm:$0xff]
    %v132 = vld [vmem:[#allocation7 + $0x68] sm:$0xff]
    %v133 = vld [vmem:[#allocation7 + $0x70] sm:$0xff]
    %v134 = vld [vmem:[#allocation7 + $0x78] sm:$0xff]
    %v135 = vld [vmem:[#allocation7 + $0x80] sm:$0xff]
    %v136 = vld [vmem:[#allocation7 + $0x88] sm:$0xff]
    %v137 = vld [vmem:[#allocation7 + $0x90] sm:$0xff]
    %v138 = vld [vmem:[#allocation7 + $0x98] sm:$0xff]
    %v139 = vld [vmem:[#allocation7 + $0xa0] sm:$0xff]
    %v140 = vld [vmem:[#allocation7 + $0xa8] sm:$0xff]
    %v141 = vld [vmem:[#allocation7 + $0xb0] sm:$0xff]
    %v142 = vld [vmem:[#allocation7 + $0xb8] sm:$0xff]
    %v143 = vld [vmem:[%s0] sm:$0xff]
    %v144 = vld [vmem:[%s0 + $0x8] sm:$0xff]
    %v145 = vld [vmem:[%s0 + $0x10] sm:$0xff]
    %v146 = vld [vmem:[%s0 + $0x18] sm:$0xff]
    %v147 = vld [vmem:[%s0 + $0x20] sm:$0xff]
    %v148 = vld [vmem:[%s0 + $0x28] sm:$0xff]
    %v149 = vld [vmem:[%s0 + $0x30] sm:$0xff]
    %v150 = vld [vmem:[%s0 + $0x38] sm:$0xff]
    %v151 = vld [vmem:[%s0 + $0x40] sm:$0xff]
    %v152 = vld [vmem:[%s0 + $0x48] sm:$0xff]
    %v153 = vld [vmem:[%s0 + $0x50] sm:$0xff]
    %v154 = vld [vmem:[%s0 + $0x58] sm:$0xff]
    %156 = vset.pattern.permute.xlu0 0
    %157 = vperm.xlu0 %156, %v143
    %v158 = vpop.permute.xlu0 %157
    %161 = vset.pattern.permute.xlu0 0
    %162 = vperm.xlu0 %161, %v144
    %v163 = vpop.permute.xlu0 %162
    %166 = vset.pattern.permute.xlu0 0
    %167 = vperm.xlu0 %166, %v145
    %v168 = vpop.permute.xlu0 %167
    %171 = vset.pattern.permute.xlu0 0
    %172 = vperm.xlu0 %171, %v146
    %v173 = vpop.permute.xlu0 %172
    %176 = vset.pattern.permute.xlu0 0
    %177 = vperm.xlu0 %176, %v147
    %v178 = vpop.permute.xlu0 %177
    %181 = vset.pattern.permute.xlu0 0
    %182 = vperm.xlu0 %181, %v148
    %v183 = vpop.permute.xlu0 %182
    %186 = vset.pattern.permute.xlu0 0
    %187 = vperm.xlu0 %186, %v149
    %v188 = vpop.permute.xlu0 %187
    %191 = vset.pattern.permute.xlu0 0
    %192 = vperm.xlu0 %191, %v150
    %v193 = vpop.permute.xlu0 %192
    %196 = vset.pattern.permute.xlu0 0
    %197 = vperm.xlu0 %196, %v151
    %v198 = vpop.permute.xlu0 %197
    %201 = vset.pattern.permute.xlu0 0
    %202 = vperm.xlu0 %201, %v152
    %v203 = vpop.permute.xlu0 %202
    %206 = vset.pattern.permute.xlu0 0
    %207 = vperm.xlu0 %206, %v153
    %v208 = vpop.permute.xlu0 %207
    %211 = vset.pattern.permute.xlu0 0
    %212 = vperm.xlu0 %211, %v154
    %v213 = vpop.permute.xlu0 %212
    %v215 = vmul.f32 %v71, %v158
    %v216 = vmul.f32 %v72, %v163
    %v217 = vmul.f32 %v73, %v168
    %v218 = vmul.f32 %v74, %v173
    %v219 = vmul.f32 %v75, %v178
    %v220 = vmul.f32 %v76, %v183
    %v221 = vmul.f32 %v77, %v188
    %v222 = vmul.f32 %v78, %v193
    %v223 = vmul.f32 %v79, %v198
    %v224 = vmul.f32 %v80, %v203
    %v225 = vmul.f32 %v81, %v208
    %v226 = vmul.f32 %v82, %v213
    %v227 = vmul.f32 %v83, %v158
    %v228 = vmul.f32 %v84, %v163
    %v229 = vmul.f32 %v85, %v168
    %v230 = vmul.f32 %v86, %v173
    %v231 = vmul.f32 %v87, %v178
    %v232 = vmul.f32 %v88, %v183
    %v233 = vmul.f32 %v89, %v188
    %v234 = vmul.f32 %v90, %v193
    %v235 = vmul.f32 %v91, %v198
    %v236 = vmul.f32 %v92, %v203
    %v237 = vmul.f32 %v93, %v208
    %v238 = vmul.f32 %v94, %v213
    %239 = vset.pattern.permute.xlu0 1
    %240 = vperm.xlu0 %239, %v143
    %v241 = vpop.permute.xlu0 %240
    %243 = vset.pattern.permute.xlu0 1
    %244 = vperm.xlu0 %243, %v144
    %v245 = vpop.permute.xlu0 %244
    %247 = vset.pattern.permute.xlu0 1
    %248 = vperm.xlu0 %247, %v145
    %v249 = vpop.permute.xlu0 %248
    %251 = vset.pattern.permute.xlu0 1
    %252 = vperm.xlu0 %251, %v146
    %v253 = vpop.permute.xlu0 %252
    %255 = vset.pattern.permute.xlu0 1
    %256 = vperm.xlu0 %255, %v147
    %v257 = vpop.permute.xlu0 %256
    %259 = vset.pattern.permute.xlu0 1
    %260 = vperm.xlu0 %259, %v148
    %v261 = vpop.permute.xlu0 %260
    %263 = vset.pattern.permute.xlu0 1
    %264 = vperm.xlu0 %263, %v149
    %v265 = vpop.permute.xlu0 %264
    %267 = vset.pattern.permute.xlu0 1
    %268 = vperm.xlu0 %267, %v150
    %v269 = vpop.permute.xlu0 %268
    %271 = vset.pattern.permute.xlu0 1
    %272 = vperm.xlu0 %271, %v151
    %v273 = vpop.permute.xlu0 %272
    %275 = vset.pattern.permute.xlu0 1
    %276 = vperm.xlu0 %275, %v152
    %v277 = vpop.permute.xlu0 %276
    %279 = vset.pattern.permute.xlu0 1
    %280 = vperm.xlu0 %279, %v153
    %v281 = vpop.permute.xlu0 %280
    %283 = vset.pattern.permute.xlu0 1
    %284 = vperm.xlu0 %283, %v154
    %v285 = vpop.permute.xlu0 %284
    %v287 = vmul.f32 %v95, %v241
    %v288 = vmul.f32 %v96, %v245
    %v289 = vmul.f32 %v97, %v249
    %v290 = vmul.f32 %v98, %v253
    %v291 = vmul.f32 %v99, %v257
    %v292 = vmul.f32 %v100, %v261
    %v293 = vmul.f32 %v101, %v265
    %v294 = vmul.f32 %v102, %v269
    %v295 = vmul.f32 %v103, %v273
    %v296 = vmul.f32 %v104, %v277
    %v297 = vmul.f32 %v105, %v281
    %v298 = vmul.f32 %v106, %v285
    %v299 = vmul.f32 %v107, %v241
    %v300 = vmul.f32 %v108, %v245
    %v301 = vmul.f32 %v109, %v249
    %v302 = vmul.f32 %v110, %v253
    %v303 = vmul.f32 %v111, %v257
    %v304 = vmul.f32 %v112, %v261
    %v305 = vmul.f32 %v113, %v265
    %v306 = vmul.f32 %v114, %v269
    %v307 = vmul.f32 %v115, %v273
    %v308 = vmul.f32 %v116, %v277
    %v309 = vmul.f32 %v117, %v281
    %v310 = vmul.f32 %v118, %v285
    %v311 = vadd.f32 %v215, %v287
    %v312 = vadd.f32 %v216, %v288
    %v313 = vadd.f32 %v217, %v289
    %v314 = vadd.f32 %v218, %v290
    %v315 = vadd.f32 %v219, %v291
    %v316 = vadd.f32 %v220, %v292
    %v317 = vadd.f32 %v221, %v293
    %v318 = vadd.f32 %v222, %v294
    %v319 = vadd.f32 %v223, %v295
    %v320 = vadd.f32 %v224, %v296
    %v321 = vadd.f32 %v225, %v297
    %v322 = vadd.f32 %v226, %v298
    %v323 = vadd.f32 %v227, %v299
    %v324 = vadd.f32 %v228, %v300
    %v325 = vadd.f32 %v229, %v301
    %v326 = vadd.f32 %v230, %v302
    %v327 = vadd.f32 %v231, %v303
    %v328 = vadd.f32 %v232, %v304
    %v329 = vadd.f32 %v233, %v305
    %v330 = vadd.f32 %v234, %v306
    %v331 = vadd.f32 %v235, %v307
    %v332 = vadd.f32 %v236, %v308
    %v333 = vadd.f32 %v237, %v309
    %v334 = vadd.f32 %v238, %v310
    %v335 = vadd.f32 %v311, %v312
    %v336 = vadd.f32 %v335, %v313
    %v337 = vadd.f32 %v336, %v314
    %v338 = vadd.f32 %v337, %v315
    %v339 = vadd.f32 %v338, %v316
    %v340 = vadd.f32 %v339, %v317
    %v341 = vadd.f32 %v340, %v318
    %v342 = vadd.f32 %v341, %v319
    %v343 = vadd.f32 %v342, %v320
    %v344 = vadd.f32 %v343, %v321
    %v345 = vadd.f32 %v344, %v322
    %v346 = vrot.slane %v345, 4
    %v347 = vadd.f32 %v345, %v346
    %v348 = vrot.slane %v347, 2
    %v349 = vadd.f32 %v347, %v348
    %v350 = vrot.slane %v349, 1
    %v351 = vadd.f32 %v349, %v350
    %v352 = vadd.f32 %v323, %v324
    %v353 = vadd.f32 %v352, %v325
    %v354 = vadd.f32 %v353, %v326
    %v355 = vadd.f32 %v354, %v327
    %v356 = vadd.f32 %v355, %v328
    %v357 = vadd.f32 %v356, %v329
    %v358 = vadd.f32 %v357, %v330
    %v359 = vadd.f32 %v358, %v331
    %v360 = vadd.f32 %v359, %v332
    %v361 = vadd.f32 %v360, %v333
    %v362 = vadd.f32 %v361, %v334
    %v363 = vrot.slane %v362, 4
    %v364 = vadd.f32 %v362, %v363
    %v365 = vrot.slane %v364, 2
    %v366 = vadd.f32 %v364, %v365
    %v367 = vrot.slane %v366, 1
    %v368 = vadd.f32 %v366, %v367
    %369 = vset.pattern.permute.xlu0 2
    %370 = vperm.xlu0 %369, %v143
    %v371 = vpop.permute.xlu0 %370
    %373 = vset.pattern.permute.xlu0 2
    %374 = vperm.xlu0 %373, %v144
    %v375 = vpop.permute.xlu0 %374
    %377 = vset.pattern.permute.xlu0 2
    %378 = vperm.xlu0 %377, %v145
    %v379 = vpop.permute.xlu0 %378
    %381 = vset.pattern.permute.xlu0 2
    %382 = vperm.xlu0 %381, %v146
    %v383 = vpop.permute.xlu0 %382
    %385 = vset.pattern.permute.xlu0 2
    %386 = vperm.xlu0 %385, %v147
    %v387 = vpop.permute.xlu0 %386
    %389 = vset.pattern.permute.xlu0 2
    %390 = vperm.xlu0 %389, %v148
    %v391 = vpop.permute.xlu0 %390
    %393 = vset.pattern.permute.xlu0 2
    %394 = vperm.xlu0 %393, %v149
    %v395 = vpop.permute.xlu0 %394
    %397 = vset.pattern.permute.xlu0 2
    %398 = vperm.xlu0 %397, %v150
    %v399 = vpop.permute.xlu0 %398
    %401 = vset.pattern.permute.xlu0 2
    %402 = vperm.xlu0 %401, %v151
    %v403 = vpop.permute.xlu0 %402
    %405 = vset.pattern.permute.xlu0 2
    %406 = vperm.xlu0 %405, %v152
    %v407 = vpop.permute.xlu0 %406
    %409 = vset.pattern.permute.xlu0 2
    %410 = vperm.xlu0 %409, %v153
    %v411 = vpop.permute.xlu0 %410
    %413 = vset.pattern.permute.xlu0 2
    %414 = vperm.xlu0 %413, %v154
    %v415 = vpop.permute.xlu0 %414
    %v417 = vmul.f32 %v71, %v371
    %v418 = vmul.f32 %v72, %v375
    %v419 = vmul.f32 %v73, %v379
    %v420 = vmul.f32 %v74, %v383
    %v421 = vmul.f32 %v75, %v387
    %v422 = vmul.f32 %v76, %v391
    %v423 = vmul.f32 %v77, %v395
    %v424 = vmul.f32 %v78, %v399
    %v425 = vmul.f32 %v79, %v403
    %v426 = vmul.f32 %v80, %v407
    %v427 = vmul.f32 %v81, %v411
    %v428 = vmul.f32 %v82, %v415
    %v429 = vmul.f32 %v83, %v371
    %v430 = vmul.f32 %v84, %v375
    %v431 = vmul.f32 %v85, %v379
    %v432 = vmul.f32 %v86, %v383
    %v433 = vmul.f32 %v87, %v387
    %v434 = vmul.f32 %v88, %v391
    %v435 = vmul.f32 %v89, %v395
    %v436 = vmul.f32 %v90, %v399
    %v437 = vmul.f32 %v91, %v403
    %v438 = vmul.f32 %v92, %v407
    %v439 = vmul.f32 %v93, %v411
    %v440 = vmul.f32 %v94, %v415
    %441 = vset.pattern.permute.xlu0 3
    %442 = vperm.xlu0 %441, %v143
    %v443 = vpop.permute.xlu0 %442
    %445 = vset.pattern.permute.xlu0 3
    %446 = vperm.xlu0 %445, %v144
    %v447 = vpop.permute.xlu0 %446
    %449 = vset.pattern.permute.xlu0 3
    %450 = vperm.xlu0 %449, %v145
    %v451 = vpop.permute.xlu0 %450
    %453 = vset.pattern.permute.xlu0 3
    %454 = vperm.xlu0 %453, %v146
    %v455 = vpop.permute.xlu0 %454
    %457 = vset.pattern.permute.xlu0 3
    %458 = vperm.xlu0 %457, %v147
    %v459 = vpop.permute.xlu0 %458
    %461 = vset.pattern.permute.xlu0 3
    %462 = vperm.xlu0 %461, %v148
    %v463 = vpop.permute.xlu0 %462
    %465 = vset.pattern.permute.xlu0 3
    %466 = vperm.xlu0 %465, %v149
    %v467 = vpop.permute.xlu0 %466
    %469 = vset.pattern.permute.xlu0 3
    %470 = vperm.xlu0 %469, %v150
    %v471 = vpop.permute.xlu0 %470
    %473 = vset.pattern.permute.xlu0 3
    %474 = vperm.xlu0 %473, %v151
    %v475 = vpop.permute.xlu0 %474
    %477 = vset.pattern.permute.xlu0 3
    %478 = vperm.xlu0 %477, %v152
    %v479 = vpop.permute.xlu0 %478
    %481 = vset.pattern.permute.xlu0 3
    %482 = vperm.xlu0 %481, %v153
    %v483 = vpop.permute.xlu0 %482
    %485 = vset.pattern.permute.xlu0 3
    %486 = vperm.xlu0 %485, %v154
    %v487 = vpop.permute.xlu0 %486
    %v489 = vmul.f32 %v119, %v443
    %v490 = vmul.f32 %v120, %v447
    %v491 = vmul.f32 %v121, %v451
    %v492 = vmul.f32 %v122, %v455
    %v493 = vmul.f32 %v123, %v459
    %v494 = vmul.f32 %v124, %v463
    %v495 = vmul.f32 %v125, %v467
    %v496 = vmul.f32 %v126, %v471
    %v497 = vmul.f32 %v127, %v475
    %v498 = vmul.f32 %v128, %v479
    %v499 = vmul.f32 %v129, %v483
    %v500 = vmul.f32 %v130, %v487
    %v501 = vmul.f32 %v131, %v443
    %v502 = vmul.f32 %v132, %v447
    %v503 = vmul.f32 %v133, %v451
    %v504 = vmul.f32 %v134, %v455
    %v505 = vmul.f32 %v135, %v459
    %v506 = vmul.f32 %v136, %v463
    %v507 = vmul.f32 %v137, %v467
    %v508 = vmul.f32 %v138, %v471
    %v509 = vmul.f32 %v139, %v475
    %v510 = vmul.f32 %v140, %v479
    %v511 = vmul.f32 %v141, %v483
    %v512 = vmul.f32 %v142, %v487
    %v513 = vadd.f32 %v417, %v489
    %v514 = vadd.f32 %v418, %v490
    %v515 = vadd.f32 %v419, %v491
    %v516 = vadd.f32 %v420, %v492
    %v517 = vadd.f32 %v421, %v493
    %v518 = vadd.f32 %v422, %v494
    %v519 = vadd.f32 %v423, %v495
    %v520 = vadd.f32 %v424, %v496
    %v521 = vadd.f32 %v425, %v497
    %v522 = vadd.f32 %v426, %v498
    %v523 = vadd.f32 %v427, %v499
    %v524 = vadd.f32 %v428, %v500
    %v525 = vadd.f32 %v429, %v501
    %v526 = vadd.f32 %v430, %v502
    %v527 = vadd.f32 %v431, %v503
    %v528 = vadd.f32 %v432, %v504
    %v529 = vadd.f32 %v433, %v505
    %v530 = vadd.f32 %v434, %v506
    %v531 = vadd.f32 %v435, %v507
    %v532 = vadd.f32 %v436, %v508
    %v533 = vadd.f32 %v437, %v509
    %v534 = vadd.f32 %v438, %v510
    %v535 = vadd.f32 %v439, %v511
    %v536 = vadd.f32 %v440, %v512
    %v537 = vadd.f32 %v513, %v514
    %v538 = vadd.f32 %v537, %v515
    %v539 = vadd.f32 %v538, %v516
    %v540 = vadd.f32 %v539, %v517
    %v541 = vadd.f32 %v540, %v518
    %v542 = vadd.f32 %v541, %v519
    %v543 = vadd.f32 %v542, %v520
    %v544 = vadd.f32 %v543, %v521
    %v545 = vadd.f32 %v544, %v522
    %v546 = vadd.f32 %v545, %v523
    %v547 = vadd.f32 %v546, %v524
    %v548 = vrot.slane %v547, 4
    %v549 = vadd.f32 %v547, %v548
    %v550 = vrot.slane %v549, 2
    %v551 = vadd.f32 %v549, %v550
    %v552 = vrot.slane %v551, 1
    %v553 = vadd.f32 %v551, %v552
    %v554 = vadd.f32 %v525, %v526
    %v555 = vadd.f32 %v554, %v527
    %v556 = vadd.f32 %v555, %v528
    %v557 = vadd.f32 %v556, %v529
    %v558 = vadd.f32 %v557, %v530
    %v559 = vadd.f32 %v558, %v531
    %v560 = vadd.f32 %v559, %v532
    %v561 = vadd.f32 %v560, %v533
    %v562 = vadd.f32 %v561, %v534
    %v563 = vadd.f32 %v562, %v535
    %v564 = vadd.f32 %v563, %v536
    %v565 = vrot.slane %v564, 4
    %v566 = vadd.f32 %v564, %v565
    %v567 = vrot.slane %v566, 2
    %v568 = vadd.f32 %v566, %v567
    %v569 = vrot.slane %v568, 1
    %v570 = vadd.f32 %v568, %v569
    %v571 = vld [vmem:[%s4] sm:$0x3]
    %vm572 = vcmp.ne.f32.partialorder %v571, 0.0
    %vm575 = vcmask 1041409
    %v576 = vsel %vm575, %v368, %v351
    %v578 = vsel %vm572, -1e+30, %v576
    %v581 = vsel %vm575, %v570, %v553
    %v583 = vsel %vm572, -1e+30, %v581
    %vm584 = vcmask 1041408
    %v585 = vsel %vm584, %v578, -inf
    %586 = vmax.xlane.f32.xlu0 %v585
    %v587 = vpop.xlane.xlu0 %586
    %v588 = vsub.f32 %v578, %v587
    %v589 = vmul.f32 %v588, 1.442695
    %v590 = vpow.pop %v589
    %v591 = vsel %vm584, %v590, 0.0
    %592 = vadd.xlane.f32.xlu0 %v591
    %v593 = vpop.xlane.xlu0 %592
    %v594 = vlog2.pop %v593
    %v595 = vmul.f32 %v594, 0.6931472
    %v596 = vsub.f32 %v588, %v595
    %597 = vst [vmem:[#allocation8] sm:$0x3] %v596
    %v598 = vsel %vm584, %v583, -inf
    %599 = vmax.xlane.f32.xlu0 %v598
    %v600 = vpop.xlane.xlu0 %599
    %v601 = vsub.f32 %v583, %v600
    %v602 = vmul.f32 %v601, 1.442695
    %v603 = vpow.pop %v602
    %v604 = vsel %vm584, %v603, 0.0
    %605 = vadd.xlane.f32.xlu0 %v604
    %v606 = vpop.xlane.xlu0 %605
    %v607 = vlog2.pop %v606
    %v608 = vmul.f32 %v607, 0.6931472
    %v609 = vsub.f32 %v601, %v608
    %610 = vst [vmem:[#allocation9] sm:$0x3] %v609
    // Predicated region
    $region34: #{tpu_custom_call.1} parent=1 // pred_check
      _
    $region35: #{tpu_custom_call.1} parent=1 // pred_check_branch
      %612 = sbr.rel (0) target = $region37
    $region36: #{tpu_custom_call.1} parent=1 // pred_region
      %614 = vsyncadd [#allocation4], 0
      %s616 = sshll.u32 [#allocation8], 4
      %s617 = int_to_ptr.vmem [resolvable:$true] %s616
      %s618 = sshll.u32 %s5, 4
      %s619 = int_to_ptr.hbm [resolvable:$true] %s618
      %621 = dma.vmem_to_hbm [thread:$0]  %s617, 32, %s619, [#allocation4]
    $region37: #{tpu_custom_call.1} parent=1 // pred_fallthru
      _
    // Predicated region
    $region38: #{tpu_custom_call.1} parent=1 // pred_check
      _
    $region39: #{tpu_custom_call.1} parent=1 // pred_check_branch
      %623 = sbr.rel (0) target = $region41
    $region40: #{tpu_custom_call.1} parent=1 // pred_region
      %625 = vsyncadd [#allocation10], 0
      %s627 = sshll.u32 [#allocation9], 4
      %s628 = int_to_ptr.vmem [resolvable:$true] %s627
      %s629 = sshll.u32 %s6, 4
      %s630 = int_to_ptr.hbm [resolvable:$true] %s629
      %632 = dma.vmem_to_hbm [thread:$0]  %s628, 32, %s630, [#allocation10]
    $region41: #{tpu_custom_call.1} parent=1 // pred_fallthru
      _
    // Predicated region
    $region42: #{tpu_custom_call.1} parent=1 // pred_check
      _
    $region43: #{tpu_custom_call.1} parent=1 // pred_check_branch
      %634 = sbr.rel (0) target = $region45
    $region44: #{tpu_custom_call.1} parent=1 // pred_region
      %636 = dma.done [#allocation4], 32
    $region45: #{tpu_custom_call.1} parent=1 // pred_fallthru
      _
    // Predicated region
    $region46: #{tpu_custom_call.1} parent=1 // pred_check
      _
    $region47: #{tpu_custom_call.1} parent=1 // pred_check_branch
      %638 = sbr.rel (0) target = $region49
    $region48: #{tpu_custom_call.1} parent=1 // pred_region
      %640 = dma.done [#allocation10], 32
    $region49: #{tpu_custom_call.1} parent=1 // pred_fallthru
      _
    %641 = vsyncpa [#allocation3], 1
    %642 = vsyncpa [#allocation6], 1
    %643 = vsyncpa [#allocation4], 1
    %644 = vsyncpa [#allocation10], 1

</llo_original>
